<compile_context>
chip_gen: v5e
topology: v5e:2x2
jax: 0.10.0
libtpu: 0.0.40
codegen_flags: <defaults>
</compile_context>

<pallas_src>
import jax
import jax.numpy as jnp
from jax.experimental import pallas as pl
from jax.experimental.pallas import tpu as pltpu


def _round_up(x, m):
    return ((x + m - 1) // m) * m


def _encoder_kernel(x_ref, w1_ref, b1_ref, w2mu_ref, b2mu_ref, w2lv_ref, b2lv_ref,
                    mu_ref, std_ref):
    x = x_ref[...]                                              # (TB, obs)

    # Fused layer 1 (both heads): one wide MXU matmul + single ReLU pass.
    h = jnp.dot(x, w1_ref[...], preferred_element_type=jnp.float32) + b1_ref[...]
    h = jnp.maximum(h, 0.0)                                     # (TB, 2*hidden) f32
    h = h.astype(w2mu_ref.dtype)                                # compute dtype for 2nd matmul

    # mu head (bottom half of w2mu is zero -> only the mu hidden block matters).
    mu_ref[...] = (jnp.dot(h, w2mu_ref[...], preferred_element_type=jnp.float32)
                   + b2mu_ref[...])

    # std head: 0.5 factor already folded into w2_lv / b2_lv at pack time.
    lv = (jnp.dot(h, w2lv_ref[...], preferred_element_type=jnp.float32)
          + b2lv_ref[...])
    std_ref[...] = jnp.exp(lv)


def pack_encoder_params(params, compute_dtype=jnp.bfloat16):
    """Pack raw per-head weights once (hoisted out of the per-call path)."""
    hidden_dim = params["w1_mu"].shape[1]
    latent_dim = params["w2_mu"].shape[1]

    w1 = jnp.concatenate([params["w1_mu"], params["w1_lv"]], axis=1).astype(compute_dtype)
    b1 = jnp.concatenate([params["b1_mu"], params["b1_lv"]], axis=1).astype(jnp.float32)

    zeros = jnp.zeros((hidden_dim, latent_dim), jnp.float32)
    w2_mu = jnp.concatenate([params["w2_mu"], zeros], axis=0).astype(compute_dtype)
    # Fold the 0.5 of exp(0.5 * log_var) into the log_var head.
    w2_lv = jnp.concatenate([zeros, 0.5 * params["w2_lv"]], axis=0).astype(compute_dtype)
    b2_mu = params["b2_mu"].astype(jnp.float32)
    b2_lv = (0.5 * params["b2_lv"]).astype(jnp.float32)

    return dict(w1=w1, b1=b1, w2_mu=w2_mu, b2_mu=b2_mu, w2_lv=w2_lv, b2_lv=b2_lv)


def encoder_forward(x, packed):
    """x: (batch, observed_dim) float32. Returns (mu, std), each (batch, latent_dim) f32."""
    batch, obs_dim = x.shape
    w1, b1 = packed["w1"], packed["b1"]
    w2_mu, b2_mu = packed["w2_mu"], packed["b2_mu"]
    w2_lv, b2_lv = packed["w2_lv"], packed["b2_lv"]
    hidden_cat = w1.shape[1]
    latent_dim = w2_mu.shape[1]

    cdt = w1.dtype                                # compute/storage dtype of x & weights
    xbytes = jnp.dtype(cdt).itemsize
    x = x.astype(cdt)

    # ---------------- batch tiling ----------------
    sub = 16 if xbytes == 2 else 8                # sublane granule for this dtype
    budget = 12 * 1024 * 1024                     # VMEM budget for tiled buffers (v5e-safe)
    weights_bytes = (2 * (w1.size + w2_mu.size + w2_lv.size) * xbytes
                     + 2 * (b1.size + b2_mu.size + b2_lv.size) * 4)
    per_row = (2 * obs_dim * xbytes               # x, double-buffered
               + hidden_cat * 4                   # h temp (f32)
               + hidden_cat * xbytes              # h cast for 2nd matmul
               + 2 * 2 * latent_dim * 4           # mu/std outputs, double-buffered
               + 2 * latent_dim * 4)              # in-register temps
    fit_rows = max(sub, (budget - weights_bytes) // max(per_row, 1))
    max_tile = int(max(sub, min(1024, (fit_rows // sub) * sub)))

    if batch <= 2 * sub:
        # Tiny batch: single full-extent block (any size legal when == full dim).
        tile_b, grid_b = batch, 1
    else:
        # Target max_tile rows, but keep >= 2 grid steps so both v7x TensorCores
        # get work; tile must be a multiple of the sublane granule.  The batch is
        # NOT padded: the tail block is partial and handled by Pallas masking.
        tile_b = min(max_tile, _round_up(pl.cdiv(batch, 2), sub))
        grid_b = int(pl.cdiv(batch, tile_b))

    flops = 2 * batch * (obs_dim * hidden_cat + 2 * hidden_cat * latent_dim)
    bytes_accessed = (x.size * xbytes
                      + (w1.size + w2_mu.size + w2_lv.size) * xbytes
                      + (b1.size + b2_mu.size + b2_lv.size) * 4
                      + 2 * batch * latent_dim * 4)

    vmem_limit = int(min(max(2 * (weights_bytes + tile_b * per_row), 16 << 20), 48 << 20))

    mu, std = pl.pallas_call(
        _encoder_kernel,
        out_shape=(
            jax.ShapeDtypeStruct((batch, latent_dim), jnp.float32),
            jax.ShapeDtypeStruct((batch, latent_dim), jnp.float32),
        ),
        grid_spec=pltpu.PrefetchScalarGridSpec(
            num_scalar_prefetch=0,
            grid=(grid_b,),
            in_specs=[
                pl.BlockSpec((tile_b, obs_dim), lambda i: (i, 0)),        # x: tiled over batch
                pl.BlockSpec((obs_dim, hidden_cat), lambda i: (0, 0)),    # W1_cat resident
                pl.BlockSpec((1, hidden_cat), lambda i: (0, 0)),          # b1_cat
                pl.BlockSpec((hidden_cat, latent_dim), lambda i: (0, 0)), # W2_mu (padded K)
                pl.BlockSpec((1, latent_dim), lambda i: (0, 0)),          # b2_mu
                pl.BlockSpec((hidden_cat, latent_dim), lambda i: (0, 0)), # W2_lv (0.5 folded)
                pl.BlockSpec((1, latent_dim), lambda i: (0, 0)),          # b2_lv (0.5 folded)
            ],
            out_specs=[
                pl.BlockSpec((tile_b, latent_dim), lambda i: (i, 0)),     # mu
                pl.BlockSpec((tile_b, latent_dim), lambda i: (i, 0)),     # std
            ],
        ),
        compiler_params=pltpu.CompilerParams(
            dimension_semantics=("parallel",),
            vmem_limit_bytes=vmem_limit,
        ),
        cost_estimate=pl.CostEstimate(
            flops=flops,
            transcendentals=batch * latent_dim,
            bytes_accessed=bytes_accessed,
        ),
    )(x, w1, b1, w2_mu, b2_mu, w2_lv, b2_lv)

    return mu, std


# ----------------------------- params / reference -----------------------------

def init_linear(key, fan_in, fan_out):
    """Deterministic PyTorch-style Linear init: U(-1/sqrt(fan_in), +1/sqrt(fan_in))."""
    kw, kb = jax.random.split(key)
    bound = 1.0 / jnp.sqrt(jnp.float32(fan_in))
    w = jax.random.uniform(kw, (fan_in, fan_out), jnp.float32, -bound, bound)
    b = jax.random.uniform(kb, (1, fan_out), jnp.float32, -bound, bound)
    return w, b


def init_encoder_params(key, observed_dim, hidden_dim, latent_dim):
    k1, k2, k3, k4 = jax.random.split(key, 4)
    w1_mu, b1_mu = init_linear(k1, observed_dim, hidden_dim)
    w2_mu, b2_mu = init_linear(k2, hidden_dim, latent_dim)
    w1_lv, b1_lv = init_linear(k3, observed_dim, hidden_dim)
    w2_lv, b2_lv = init_linear(k4, hidden_dim, latent_dim)
    return dict(w1_mu=w1_mu, b1_mu=b1_mu, w2_mu=w2_mu, b2_mu=b2_mu,
                w1_lv=w1_lv, b1_lv=b1_lv, w2_lv=w2_lv, b2_lv=b2_lv)


def encoder_reference(x, p):
    """Plain-JAX reference (mirrors the PyTorch module)."""
    h_mu = jnp.maximum(x @ p["w1_mu"] + p["b1_mu"], 0.0)
    mu = h_mu @ p["w2_mu"] + p["b2_mu"]
    h_lv = jnp.maximum(x @ p["w1_lv"] + p["b1_lv"], 0.0)
    log_var = h_lv @ p["w2_lv"] + p["b2_lv"]
    return mu, jnp.exp(0.5 * log_var)


if __name__ == "__main__":
    batch, observed_dim, hidden_dim, latent_dim = 8, 32, 32, 16

    key = jax.random.PRNGKey(0)
    k_x, k_p = jax.random.split(key)
    x = jax.random.normal(k_x, (batch, observed_dim), jnp.float32)
    params = init_encoder_params(k_p, observed_dim, hidden_dim, latent_dim)
    mu_ref, std_ref = encoder_reference(x, params)

    # 1) f32 storage path: tight tolerance against the reference.
    packed_f32 = pack_encoder_params(params, compute_dtype=jnp.float32)
    mu, std = encoder_forward(x, packed_f32)
    jax.block_until_ready((mu, std))
    assert mu.shape == (batch, latent_dim) and std.shape == (batch, latent_dim)
    assert jnp.allclose(mu, mu_ref, atol=1e-5, rtol=1e-5)
    assert jnp.allclose(std, std_ref, atol=1e-5, rtol=1e-5)

    # 2) bf16 storage path (halves HBM read bytes; f32 accumulation/elementwise).
    packed_bf16 = pack_encoder_params(params, compute_dtype=jnp.bfloat16)
    mu16, std16 = encoder_forward(x, packed_bf16)
    jax.block_until_ready((mu16, std16))
    assert jnp.allclose(mu16, mu_ref, atol=5e-2, rtol=5e-2)
    assert jnp.allclose(std16, std_ref, atol=5e-2, rtol=5e-2)

    # 3) multi-step grid path (>= 2 grid steps + partial tail block, no padding).
    batch2 = 200
    x2 = jax.random.normal(jax.random.PRNGKey(1), (batch2, observed_dim), jnp.float32)
    mu2, std2 = encoder_forward(x2, packed_f32)
    jax.block_until_ready((mu2, std2))
    mu2_ref, std2_ref = encoder_reference(x2, params)
    assert jnp.allclose(mu2, mu2_ref, atol=1e-5, rtol=1e-5)
    assert jnp.allclose(std2, std2_ref, atol=1e-5, rtol=1e-5)

    print("KERNEL_OK")
</pallas_src>

<mosaic_0001>
module attributes {stable_mosaic.version = 11 : i64} {
  func.func @_encoder_kernel(%arg0: i32, %arg1: memref<8x32xf32, #tpu.memory_space<vmem>>, %arg2: memref<32x64xf32, #tpu.memory_space<vmem>>, %arg3: memref<1x64xf32, #tpu.memory_space<vmem>>, %arg4: memref<64x16xf32, #tpu.memory_space<vmem>>, %arg5: memref<1x16xf32, #tpu.memory_space<vmem>>, %arg6: memref<64x16xf32, #tpu.memory_space<vmem>>, %arg7: memref<1x16xf32, #tpu.memory_space<vmem>>, %arg8: memref<8x16xf32, #tpu.memory_space<vmem>>, %arg9: memref<8x16xf32, #tpu.memory_space<vmem>>) attributes {dimension_semantics = [#tpu.dimension_semantics<parallel>], iteration_bounds = array<i64: 1>, scalar_prefetch = 0 : i64, scratch_operands = 0 : i64, tpu.core_type = #tpu.core_type<tc>, window_params = [{transform_indices = @transform_0, window_bounds = array<i64: 8, 32>}, {pipeline_mode = #tpu.pipeline_mode<synchronous>, transform_indices = @transform_1, window_bounds = array<i64: 32, 64>}, {pipeline_mode = #tpu.pipeline_mode<synchronous>, transform_indices = @transform_2, window_bounds = array<i64: 1, 64>}, {pipeline_mode = #tpu.pipeline_mode<synchronous>, transform_indices = @transform_3, window_bounds = array<i64: 64, 16>}, {pipeline_mode = #tpu.pipeline_mode<synchronous>, transform_indices = @transform_4, window_bounds = array<i64: 1, 16>}, {pipeline_mode = #tpu.pipeline_mode<synchronous>, transform_indices = @transform_5, window_bounds = array<i64: 64, 16>}, {pipeline_mode = #tpu.pipeline_mode<synchronous>, transform_indices = @transform_6, window_bounds = array<i64: 1, 16>}, {transform_indices = @transform_7, window_bounds = array<i64: 8, 16>}, {transform_indices = @transform_8, window_bounds = array<i64: 8, 16>}]} {
    %c0 = arith.constant 0 : index
    %c0_0 = arith.constant 0 : index
    %0 = vector.load %arg1[%c0, %c0_0] : memref<8x32xf32, #tpu.memory_space<vmem>>, vector<8x32xf32>
    %c0_1 = arith.constant 0 : index
    %c0_2 = arith.constant 0 : index
    %1 = vector.load %arg2[%c0_1, %c0_2] : memref<32x64xf32, #tpu.memory_space<vmem>>, vector<32x64xf32>
    %cst = arith.constant dense<0.000000e+00> : vector<8x64xf32>
    %2 = tpu.matmul %0, %1, %cst {dimension_numbers = #tpu.dot_dimension_numbers<[1], [0], [0], [1], [0, 0, 1, 1], [], []>} : vector<8x32xf32>, vector<32x64xf32>, vector<8x64xf32> -> vector<8x64xf32>
    %c0_3 = arith.constant 0 : index
    %c0_4 = arith.constant 0 : index
    %3 = vector.load %arg3[%c0_3, %c0_4] : memref<1x64xf32, #tpu.memory_space<vmem>>, vector<1x64xf32>
    %4 = vector.broadcast %3 : vector<1x64xf32> to vector<8x64xf32>
    %5 = arith.addf %2, %4 : vector<8x64xf32>
    %cst_5 = arith.constant 0.000000e+00 : f32
    %6 = vector.broadcast %cst_5 : f32 to vector<8x64xf32>
    %7 = arith.maximumf %5, %6 : vector<8x64xf32>
    %c0_6 = arith.constant 0 : index
    %c0_7 = arith.constant 0 : index
    %8 = vector.load %arg4[%c0_6, %c0_7] : memref<64x16xf32, #tpu.memory_space<vmem>>, vector<64x16xf32>
    %cst_8 = arith.constant dense<0.000000e+00> : vector<8x16xf32>
    %9 = tpu.matmul %7, %8, %cst_8 {dimension_numbers = #tpu.dot_dimension_numbers<[1], [0], [0], [1], [0, 0, 1, 1], [], []>} : vector<8x64xf32>, vector<64x16xf32>, vector<8x16xf32> -> vector<8x16xf32>
    %c0_9 = arith.constant 0 : index
    %c0_10 = arith.constant 0 : index
    %10 = vector.load %arg5[%c0_9, %c0_10] : memref<1x16xf32, #tpu.memory_space<vmem>>, vector<1x16xf32>
    %11 = vector.broadcast %10 : vector<1x16xf32> to vector<8x16xf32>
    %12 = arith.addf %9, %11 : vector<8x16xf32>
    %c0_11 = arith.constant 0 : index
    %c0_12 = arith.constant 0 : index
    %13 = vector.load %arg8[%c0_11, %c0_12] : memref<8x16xf32, #tpu.memory_space<vmem>>, vector<8x16xf32>
    tpu.vector_store %arg8[%c0_11, %c0_12], %12 {strides = array<i32>} : memref<8x16xf32, #tpu.memory_space<vmem>>, vector<8x16xf32>,
    %c0_13 = arith.constant 0 : index
    %c0_14 = arith.constant 0 : index
    %14 = vector.load %arg6[%c0_13, %c0_14] : memref<64x16xf32, #tpu.memory_space<vmem>>, vector<64x16xf32>
    %cst_15 = arith.constant dense<0.000000e+00> : vector<8x16xf32>
    %15 = tpu.matmul %7, %14, %cst_15 {dimension_numbers = #tpu.dot_dimension_numbers<[1], [0], [0], [1], [0, 0, 1, 1], [], []>} : vector<8x64xf32>, vector<64x16xf32>, vector<8x16xf32> -> vector<8x16xf32>
    %c0_16 = arith.constant 0 : index
    %c0_17 = arith.constant 0 : index
    %16 = vector.load %arg7[%c0_16, %c0_17] : memref<1x16xf32, #tpu.memory_space<vmem>>, vector<1x16xf32>
    %17 = vector.broadcast %16 : vector<1x16xf32> to vector<8x16xf32>
    %18 = arith.addf %15, %17 : vector<8x16xf32>
    %19 = math.exp %18 : vector<8x16xf32>
    %c0_18 = arith.constant 0 : index
    %c0_19 = arith.constant 0 : index
    %20 = vector.load %arg9[%c0_18, %c0_19] : memref<8x16xf32, #tpu.memory_space<vmem>>, vector<8x16xf32>
    tpu.vector_store %arg9[%c0_18, %c0_19], %19 {strides = array<i32>} : memref<8x16xf32, #tpu.memory_space<vmem>>, vector<8x16xf32>,
    return
  }
  func.func @transform_0(%arg0: i32) -> (i32, i32) {
    %c0_i32 = arith.constant 0 : i32
    %c0_i32_0 = arith.constant 0 : i32
    return %arg0, %c0_i32 : i32, i32
  }
  func.func @transform_1(%arg0: i32) -> (i32, i32) {
    %c0_i32 = arith.constant 0 : i32
    %c0_i32_0 = arith.constant 0 : i32
    %c0_i32_1 = arith.constant 0 : i32
    return %c0_i32, %c0_i32_0 : i32, i32
  }
  func.func @transform_2(%arg0: i32) -> (i32, i32) {
    %c0_i32 = arith.constant 0 : i32
    %c0_i32_0 = arith.constant 0 : i32
    %c0_i32_1 = arith.constant 0 : i32
    return %c0_i32, %c0_i32_0 : i32, i32
  }
  func.func @transform_3(%arg0: i32) -> (i32, i32) {
    %c0_i32 = arith.constant 0 : i32
    %c0_i32_0 = arith.constant 0 : i32
    %c0_i32_1 = arith.constant 0 : i32
    return %c0_i32, %c0_i32_0 : i32, i32
  }
  func.func @transform_4(%arg0: i32) -> (i32, i32) {
    %c0_i32 = arith.constant 0 : i32
    %c0_i32_0 = arith.constant 0 : i32
    %c0_i32_1 = arith.constant 0 : i32
    return %c0_i32, %c0_i32_0 : i32, i32
  }
  func.func @transform_5(%arg0: i32) -> (i32, i32) {
    %c0_i32 = arith.constant 0 : i32
    %c0_i32_0 = arith.constant 0 : i32
    %c0_i32_1 = arith.constant 0 : i32
    return %c0_i32, %c0_i32_0 : i32, i32
  }
  func.func @transform_6(%arg0: i32) -> (i32, i32) {
    %c0_i32 = arith.constant 0 : i32
    %c0_i32_0 = arith.constant 0 : i32
    %c0_i32_1 = arith.constant 0 : i32
    return %c0_i32, %c0_i32_0 : i32, i32
  }
  func.func @transform_7(%arg0: i32) -> (i32, i32) {
    %c0_i32 = arith.constant 0 : i32
    %c0_i32_0 = arith.constant 0 : i32
    return %arg0, %c0_i32 : i32, i32
  }
  func.func @transform_8(%arg0: i32) -> (i32, i32) {
    %c0_i32 = arith.constant 0 : i32
    %c0_i32_0 = arith.constant 0 : i32
    return %arg0, %c0_i32 : i32, i32
  }
}

</mosaic_0001>

<llo_original>
// kernel: tpu_custom_call.1
$region0: #{tpu_custom_call.1}
  #allocation0 [shape = 'u32[]', space=smem, size = 0x4, offset = 0x4, fixed_abs, tag = 'smem constant byte address 0x4 - core index']
  #allocation1 [shape = 'u32[72,128]{1,0:T(1,128)}', space=vmem, size = 0x9000, scoped, tag = 'internal scratch']
  %s0 = inlined_call_operand.vmem [shape: f32[8,32], index: 0, kind: input, shape index: {}]
  %s1 = inlined_call_operand.vmem [shape: f32[32,64], index: 1, kind: input, shape index: {}]
  %s2 = inlined_call_operand.vmem [shape: f32[1,64], index: 2, kind: input, shape index: {}]
  %s3 = inlined_call_operand.vmem [shape: f32[64,16], index: 3, kind: input, shape index: {}]
  %s4 = inlined_call_operand.vmem [shape: f32[1,16], index: 4, kind: input, shape index: {}]
  %s5 = inlined_call_operand.vmem [shape: f32[64,16], index: 5, kind: input, shape index: {}]
  %s6 = inlined_call_operand.vmem [shape: f32[1,16], index: 6, kind: input, shape index: {}]
  %s7 = inlined_call_operand.hbm [shape: f32[8,16], index: 7, kind: output, shape index: {0}]
  %s8 = inlined_call_operand.hbm [shape: f32[8,16], index: 8, kind: output, shape index: {1}]
  %9 = xla_tuple %s7, %s8
  %s10 = sld [smem:[#allocation0]]
  $region46: #{tpu_custom_call.1} parent=0
    _
  %s12 = ssub.s32 1, %s10
  %s13 = scalar_select 0, %s12, %s10
  $region1: #{tpu_custom_call.1} parent=0
    #allocation2 [shape = 'u8[4096]{0}', space=vmem, size = 0x1000, scoped, tag = 'output window, operand 0, single buffered']
    #allocation3 [shape = 's32[1]{0}', space=sflag, size = 0x4, scoped, tag = 'scoped memory for tpu_custom_call.1']
    #allocation4 [shape = 'u8[4096]{0}', space=vmem, size = 0x1000, scoped, tag = 'output window, operand 1, single buffered']
    #allocation5 [shape = 's32[1]{0}', space=sflag, size = 0x4, scoped, tag = 'scoped memory for tpu_custom_call.1']
    %14 = vsyncpa [#allocation3], 0
    %15 = vsyncpa [#allocation5], 0
    // Predicated region
    $region2: #{tpu_custom_call.1} parent=1 // pred_check
      _
    $region3: #{tpu_custom_call.1} parent=1 // pred_check_branch
      %17 = sbr.rel (0) target = $region5
    $region4: #{tpu_custom_call.1} parent=1 // pred_region
      _
    $region5: #{tpu_custom_call.1} parent=1 // pred_fallthru
      _
    // Predicated region
    $region6: #{tpu_custom_call.1} parent=1 // pred_check
      _
    $region7: #{tpu_custom_call.1} parent=1 // pred_check_branch
      %19 = sbr.rel (0) target = $region9
    $region8: #{tpu_custom_call.1} parent=1 // pred_region
      _
    $region9: #{tpu_custom_call.1} parent=1 // pred_fallthru
      _
    // Predicated region
    $region10: #{tpu_custom_call.1} parent=1 // pred_check
      _
    $region11: #{tpu_custom_call.1} parent=1 // pred_check_branch
      %21 = sbr.rel (0) target = $region13
    $region12: #{tpu_custom_call.1} parent=1 // pred_region
      _
    $region13: #{tpu_custom_call.1} parent=1 // pred_fallthru
      _
    // Predicated region
    $region14: #{tpu_custom_call.1} parent=1 // pred_check
      _
    $region15: #{tpu_custom_call.1} parent=1 // pred_check_branch
      %23 = sbr.rel (0) target = $region17
    $region16: #{tpu_custom_call.1} parent=1 // pred_region
      _
    $region17: #{tpu_custom_call.1} parent=1 // pred_fallthru
      _
    // Predicated region
    $region18: #{tpu_custom_call.1} parent=1 // pred_check
      _
    $region19: #{tpu_custom_call.1} parent=1 // pred_check_branch
      %25 = sbr.rel (0) target = $region21
    $region20: #{tpu_custom_call.1} parent=1 // pred_region
      _
    $region21: #{tpu_custom_call.1} parent=1 // pred_fallthru
      _
    // Predicated region
    $region22: #{tpu_custom_call.1} parent=1 // pred_check
      _
    $region23: #{tpu_custom_call.1} parent=1 // pred_check_branch
      %27 = sbr.rel (0) target = $region25
    $region24: #{tpu_custom_call.1} parent=1 // pred_region
      _
    $region25: #{tpu_custom_call.1} parent=1 // pred_fallthru
      _
    // Predicated region
    $region26: #{tpu_custom_call.1} parent=1 // pred_check
      _
    $region27: #{tpu_custom_call.1} parent=1 // pred_check_branch
      %29 = sbr.rel (0) target = $region29
    $region28: #{tpu_custom_call.1} parent=1 // pred_region
      _
    $region29: #{tpu_custom_call.1} parent=1 // pred_fallthru
      _
    %v30 = vld [vmem:[%s0] sm:$0xff]
    %v31 = vld [vmem:[%s1] sm:$0xff]
    %v32 = vld [vmem:[%s1 + $0x8] sm:$0xff]
    %v33 = vld [vmem:[%s1 + $0x10] sm:$0xff]
    %v34 = vld [vmem:[%s1 + $0x18] sm:$0xff]
    %v35 = vld [vmem:[%s2] sm:$0x1]
    %v37 = vperm.slane %v35, 0
    %vm39 = vcmask 261120
    %v41 = vsel %vm39, %v30, 0
    %43 = vmatpush.msra.mxu0 0.0
    %44 = vmatpush.msra.mxu0 0.0
    %45 = vmatpush.msra.mxu0 0.0
    %46 = vmatpush.msra.mxu0 0.0
    %47 = vmatpush.msra.mxu0 0.0
    %48 = vmatpush.msra.mxu0 0.0
    %49 = vmatpush.msra.mxu0 0.0
    %50 = vmatpush.msra.mxu0 0.0
    %51 = vmatpush.msra.mxu0 0.0
    %52 = vmatpush.msra.mxu0 0.0
    %53 = vmatpush.msra.mxu0 0.0
    %54 = vmatpush.msra.mxu0 0.0
    %55 = vmatpush.msra.mxu0 %v34
    %56 = vmatpush.msra.mxu0 %v33
    %57 = vmatpush.msra.mxu0 %v32
    %58 = vmatpush.msra.mxu0 %v31
    %59 = vmatmul.f32.gmra.mxu0 %v41
    %v60 = vpop.f32.mrf.mxu0
    %v61 = vadd.f32 %v37, %v60
    %62 = vdwg.mxu0
    %v63 = vmax.f32 %v61, 0.0
    %v64 = vld [vmem:[%s3] sm:$0xff]
    %v65 = vld [vmem:[%s3 + $0x8] sm:$0xff]
    %v66 = vld [vmem:[%s3 + $0x10] sm:$0xff]
    %v67 = vld [vmem:[%s3 + $0x18] sm:$0xff]
    %v68 = vld [vmem:[%s3 + $0x20] sm:$0xff]
    %v69 = vld [vmem:[%s3 + $0x28] sm:$0xff]
    %v70 = vld [vmem:[%s3 + $0x30] sm:$0xff]
    %v71 = vld [vmem:[%s3 + $0x38] sm:$0xff]
    %v72 = vld [vmem:[%s4] sm:$0x1]
    %v74 = vperm.slane %v72, 0
    %vm76 = vcmask 523264
    %v78 = vsel %vm76, %v63, 0
    %80 = vmatpush.msra.mxu0 0.0
    %81 = vmatpush.msra.mxu0 0.0
    %82 = vmatpush.msra.mxu0 0.0
    %83 = vmatpush.msra.mxu0 0.0
    %84 = vmatpush.msra.mxu0 0.0
    %85 = vmatpush.msra.mxu0 0.0
    %86 = vmatpush.msra.mxu0 0.0
    %87 = vmatpush.msra.mxu0 0.0
    %88 = vmatpush.msra.mxu0 %v71
    %89 = vmatpush.msra.mxu0 %v70
    %90 = vmatpush.msra.mxu0 %v69
    %91 = vmatpush.msra.mxu0 %v68
    %92 = vmatpush.msra.mxu0 %v67
    %93 = vmatpush.msra.mxu0 %v66
    %94 = vmatpush.msra.mxu0 %v65
    %95 = vmatpush.msra.mxu0 %v64
    %96 = vmatmul.f32.gmra.mxu0 %v78
    %v97 = vpop.f32.mrf.mxu0
    %v98 = vadd.f32 %v74, %v97
    %99 = vdwg.mxu0
    %vm100 = vcmask 130048
    %101 = vst.msk [vmem:[#allocation2] sm:$0xff] %vm100, %v98
    %v102 = vld [vmem:[%s5] sm:$0xff]
    %v103 = vld [vmem:[%s5 + $0x8] sm:$0xff]
    %v104 = vld [vmem:[%s5 + $0x10] sm:$0xff]
    %v105 = vld [vmem:[%s5 + $0x18] sm:$0xff]
    %v106 = vld [vmem:[%s5 + $0x20] sm:$0xff]
    %v107 = vld [vmem:[%s5 + $0x28] sm:$0xff]
    %v108 = vld [vmem:[%s5 + $0x30] sm:$0xff]
    %v109 = vld [vmem:[%s5 + $0x38] sm:$0xff]
    %v110 = vld [vmem:[%s6] sm:$0x1]
    %v112 = vperm.slane %v110, 0
    %114 = vmatpush.msra.mxu0 0.0
    %115 = vmatpush.msra.mxu0 0.0
    %116 = vmatpush.msra.mxu0 0.0
    %117 = vmatpush.msra.mxu0 0.0
    %118 = vmatpush.msra.mxu0 0.0
    %119 = vmatpush.msra.mxu0 0.0
    %120 = vmatpush.msra.mxu0 0.0
    %121 = vmatpush.msra.mxu0 0.0
    %122 = vmatpush.msra.mxu0 %v109
    %123 = vmatpush.msra.mxu0 %v108
    %124 = vmatpush.msra.mxu0 %v107
    %125 = vmatpush.msra.mxu0 %v106
    %126 = vmatpush.msra.mxu0 %v105
    %127 = vmatpush.msra.mxu0 %v104
    %128 = vmatpush.msra.mxu0 %v103
    %129 = vmatpush.msra.mxu0 %v102
    %130 = vmatmul.f32.gmra.mxu0 %v78
    %v131 = vpop.f32.mrf.mxu0
    %v132 = vadd.f32 %v112, %v131
    %133 = vdwg.mxu0
    %v134 = vmul.f32 %v132, 1.442695
    %v135 = vpow.pop %v134
    %136 = vst.msk [vmem:[#allocation4] sm:$0xff] %vm100, %v135
    // Predicated region
    $region30: #{tpu_custom_call.1} parent=1 // pred_check
      _
    $region31: #{tpu_custom_call.1} parent=1 // pred_check_branch
      %138 = sbr.rel (0) target = $region33
    $region32: #{tpu_custom_call.1} parent=1 // pred_region
      %140 = vsyncadd [#allocation3], 0
      %s142 = sshll.u32 [#allocation2], 4
      %s143 = int_to_ptr.vmem [resolvable:$true] %s142
      %s144 = sshll.u32 %s7, 4
      %s145 = int_to_ptr.hbm [resolvable:$true] %s144
      %147 = dma.vmem_to_hbm [thread:$0]  %s143, 128, %s145, [#allocation3]
    $region33: #{tpu_custom_call.1} parent=1 // pred_fallthru
      _
    // Predicated region
    $region34: #{tpu_custom_call.1} parent=1 // pred_check
      _
    $region35: #{tpu_custom_call.1} parent=1 // pred_check_branch
      %149 = sbr.rel (0) target = $region37
    $region36: #{tpu_custom_call.1} parent=1 // pred_region
      %151 = vsyncadd [#allocation5], 0
      %s153 = sshll.u32 [#allocation4], 4
      %s154 = int_to_ptr.vmem [resolvable:$true] %s153
      %s155 = sshll.u32 %s8, 4
      %s156 = int_to_ptr.hbm [resolvable:$true] %s155
      %158 = dma.vmem_to_hbm [thread:$0]  %s154, 128, %s156, [#allocation5]
    $region37: #{tpu_custom_call.1} parent=1 // pred_fallthru
      _
    // Predicated region
    $region38: #{tpu_custom_call.1} parent=1 // pred_check
      _
    $region39: #{tpu_custom_call.1} parent=1 // pred_check_branch
      %160 = sbr.rel (0) target = $region41
    $region40: #{tpu_custom_call.1} parent=1 // pred_region
      %162 = dma.done [#allocation3], 128
    $region41: #{tpu_custom_call.1} parent=1 // pred_fallthru
      _
    // Predicated region
    $region42: #{tpu_custom_call.1} parent=1 // pred_check
      _
    $region43: #{tpu_custom_call.1} parent=1 // pred_check_branch
      %164 = sbr.rel (0) target = $region45
    $region44: #{tpu_custom_call.1} parent=1 // pred_region
      %166 = dma.done [#allocation5], 128
    $region45: #{tpu_custom_call.1} parent=1 // pred_fallthru
      _
    %167 = vsyncpa [#allocation3], 1
    %168 = vsyncpa [#allocation5], 1

</llo_original>
